<compile_context>
chip_gen: v7x
topology: tpu7x:2x2x1
jax: 0.10.0
libtpu: 0.0.40
codegen_flags: <defaults>
</compile_context>

<pallas_src>
import functools

import jax
import jax.numpy as jnp
from jax.experimental import pallas as pl
from jax.experimental.pallas import tpu as pltpu


def _round_up(x, m):
    return (x + m - 1) // m * m


def _patch_embed_kernel(x_ref, w_ref, b_ref, o_ref):
    # x_ref: (TM, K) bf16, w_ref: (K, E) bf16 (VMEM-resident),
    # b_ref: (1, E) f32, o_ref: (TM, E)
    acc = jnp.dot(x_ref[...], w_ref[...], preferred_element_type=jnp.float32)
    o_ref[...] = (acc + b_ref[...]).astype(o_ref.dtype)


def patch_embed_forward(x, weight, bias, *, tubelet_size, patch_size, tile_m=512):
    """x: (B, C, T, H, W) NCTHW.  weight: (E, C, tubelet, ph, pw).  bias: (E,).

    Returns (B, num_patches, embed_dim), matching PyTorch PatchEmbed.forward.
    """
    B, C, T, H, W = x.shape
    E = weight.shape[0]
    tub = tubelet_size
    ph, pw = patch_size

    assert T % tub == 0 and H % ph == 0 and W % pw == 0
    Tp, Hp, Wp = T // tub, H // ph, W // pw
    N = Tp * Hp * Wp
    K = C * tub * ph * pw
    M = B * N

    # --- glue: non-overlapping patch extraction (reshape/transpose), in bf16 to
    #     halve the HBM traffic of this materializing transpose.
    # TODO(synk): fuse the patch extraction into the kernel via BlockSpec
    # index_maps over (B, Tp, Hp, Wp) to avoid materializing `patches` in HBM.
    x_bf = x.astype(jnp.bfloat16)
    xp = x_bf.reshape(B, C, Tp, tub, Hp, ph, Wp, pw)
    xp = xp.transpose(0, 2, 4, 6, 1, 3, 5, 7)          # (B, Tp, Hp, Wp, C, tub, ph, pw)
    patches = xp.reshape(M, K)                         # (M, K), K ordered (C, tub, ph, pw)

    w_flat = weight.reshape(E, K).T.astype(jnp.bfloat16)   # (K, E)
    b_row = bias.astype(jnp.float32).reshape(1, E)

    # --- pad to TPU-friendly shapes: lane-dense E, 128-aligned K, TM-aligned M.
    E_pad = _round_up(E, 128)
    K_pad = _round_up(K, 128)
    tm = min(_round_up(tile_m, 8), _round_up(M, 8))
    M_pad = _round_up(M, tm)

    patches = jnp.pad(patches, ((0, M_pad - M), (0, K_pad - K)))
    w_flat = jnp.pad(w_flat, ((0, K_pad - K), (0, E_pad - E)))
    b_row = jnp.pad(b_row, ((0, 0), (0, E_pad - E)))

    out_dtype = x.dtype
    out_bytes = jnp.dtype(out_dtype).itemsize
    grid = (M_pad // tm,)

    cost = pl.CostEstimate(
        flops=2 * M_pad * K_pad * E_pad,
        transcendentals=0,
        bytes_accessed=(patches.size * 2 + w_flat.size * 2 + b_row.size * 4
                        + M_pad * E_pad * out_bytes),
    )

    # Double-buffered activation + output tiles, resident weight/bias; 2x
    # headroom, clamped so it also fits v7x's 64 MiB physical VMEM.
    vmem_need = (2 * (tm * K_pad * 2 + tm * E_pad * out_bytes)
                 + 2 * (K_pad * E_pad * 2 + E_pad * 4))
    vmem_limit = int(min(max(2 * vmem_need, 32 * 1024 * 1024), 64 * 1024 * 1024))

    out = pl.pallas_call(
        _patch_embed_kernel,
        out_shape=jax.ShapeDtypeStruct((M_pad, E_pad), out_dtype),
        grid_spec=pltpu.PrefetchScalarGridSpec(
            num_scalar_prefetch=0,
            grid=grid,
            in_specs=[
                pl.BlockSpec((tm, K_pad), lambda i: (i, 0)),        # M-tiled activations
                pl.BlockSpec((K_pad, E_pad), lambda i: (0, 0)),     # weight: VMEM-resident
                pl.BlockSpec((1, E_pad), lambda i: (0, 0)),         # bias:   VMEM-resident
            ],
            out_specs=pl.BlockSpec((tm, E_pad), lambda i: (i, 0)),
        ),
        compiler_params=pltpu.CompilerParams(
            dimension_semantics=("parallel",),   # shard M-tiles across TCs on v7x
            vmem_limit_bytes=vmem_limit,
        ),
        cost_estimate=cost,
    )(patches, w_flat, b_row)

    return out[:M, :E].reshape(B, N, E)


if __name__ == "__main__":
    # Small, shape-consistent configuration:
    #   num_frames=4, img_size=16, patch_size=8, in_chans=4, embed_dim=32, tubelet=2
    # -> num_patches = (16//8)*(16//8)*(4//2) = 8
    B, C, T, H, W = 2, 4, 4, 16, 16
    embed_dim = 32
    tubelet_size = 2
    patch_size = (8, 8)

    key = jax.random.PRNGKey(0)
    kx, kw, kb = jax.random.split(key, 3)

    x = jax.random.normal(kx, (B, C, T, H, W), dtype=jnp.float32)
    weight = jax.random.normal(
        kw, (embed_dim, C, tubelet_size, patch_size[0], patch_size[1]),
        dtype=jnp.float32) * 0.02
    bias = jax.random.normal(kb, (embed_dim,), dtype=jnp.float32) * 0.02

    fwd = jax.jit(functools.partial(
        patch_embed_forward, tubelet_size=tubelet_size, patch_size=patch_size))
    out = fwd(x, weight, bias)
    jax.block_until_ready(out)

    # sanity: reference via lax conv (same semantics as PyTorch Conv3d, NCTHW),
    # computed on bf16-rounded operands to mirror the kernel's MXU casts.
    xr = x.astype(jnp.bfloat16).astype(jnp.float32)
    wr = weight.astype(jnp.bfloat16).astype(jnp.float32)
    ref = jax.lax.conv_general_dilated(
        xr, wr,
        window_strides=(tubelet_size, patch_size[0], patch_size[1]),
        padding="VALID",
        dimension_numbers=("NCTHW", "OITHW", "NCTHW"),
    ) + bias.reshape(1, embed_dim, 1, 1, 1)
    ref = ref.reshape(B, embed_dim, -1).transpose(0, 2, 1)

    assert out.shape == (B, 8, embed_dim), out.shape
    assert jnp.allclose(out, ref, atol=2e-2, rtol=2e-2), float(
        jnp.max(jnp.abs(out - ref)))

    print("KERNEL_OK")
</pallas_src>

<mosaic_0001>
module attributes {stable_mosaic.version = 11 : i64} {
  func.func @_patch_embed_kernel(%arg0: i32, %arg1: memref<16x512xbf16, #tpu.memory_space<vmem>>, %arg2: memref<512x128xbf16, #tpu.memory_space<vmem>>, %arg3: memref<1x128xf32, #tpu.memory_space<vmem>>, %arg4: memref<16x128xf32, #tpu.memory_space<vmem>>) attributes {dimension_semantics = [#tpu.dimension_semantics<parallel>], iteration_bounds = array<i64: 1>, scalar_prefetch = 0 : i64, scratch_operands = 0 : i64, tpu.core_type = #tpu.core_type<tc>, window_params = [{transform_indices = @transform_0, window_bounds = array<i64: 16, 512>}, {pipeline_mode = #tpu.pipeline_mode<synchronous>, transform_indices = @transform_1, window_bounds = array<i64: 512, 128>}, {pipeline_mode = #tpu.pipeline_mode<synchronous>, transform_indices = @transform_2, window_bounds = array<i64: 1, 128>}, {transform_indices = @transform_3, window_bounds = array<i64: 16, 128>}]} {
    %c0 = arith.constant 0 : index
    %c0_0 = arith.constant 0 : index
    %0 = vector.load %arg1[%c0, %c0_0] : memref<16x512xbf16, #tpu.memory_space<vmem>>, vector<16x512xbf16>
    %c0_1 = arith.constant 0 : index
    %c0_2 = arith.constant 0 : index
    %1 = vector.load %arg2[%c0_1, %c0_2] : memref<512x128xbf16, #tpu.memory_space<vmem>>, vector<512x128xbf16>
    %cst = arith.constant dense<0.000000e+00> : vector<16x128xf32>
    %2 = tpu.matmul %0, %1, %cst {dimension_numbers = #tpu.dot_dimension_numbers<[1], [0], [0], [1], [0, 0, 1, 1], [], []>} : vector<16x512xbf16>, vector<512x128xbf16>, vector<16x128xf32> -> vector<16x128xf32>
    %c0_3 = arith.constant 0 : index
    %c0_4 = arith.constant 0 : index
    %3 = vector.load %arg3[%c0_3, %c0_4] : memref<1x128xf32, #tpu.memory_space<vmem>>, vector<1x128xf32>
    %4 = vector.broadcast %3 : vector<1x128xf32> to vector<16x128xf32>
    %5 = arith.addf %2, %4 : vector<16x128xf32>
    %c0_5 = arith.constant 0 : index
    %c0_6 = arith.constant 0 : index
    %6 = vector.load %arg4[%c0_5, %c0_6] : memref<16x128xf32, #tpu.memory_space<vmem>>, vector<16x128xf32>
    tpu.vector_store %arg4[%c0_5, %c0_6], %5 {strides = array<i32>} : memref<16x128xf32, #tpu.memory_space<vmem>>, vector<16x128xf32>,
    return
  }
  func.func @transform_0(%arg0: i32) -> (i32, i32) {
    %c0_i32 = arith.constant 0 : i32
    %c0_i32_0 = arith.constant 0 : i32
    return %arg0, %c0_i32 : i32, i32
  }
  func.func @transform_1(%arg0: i32) -> (i32, i32) {
    %c0_i32 = arith.constant 0 : i32
    %c0_i32_0 = arith.constant 0 : i32
    %c0_i32_1 = arith.constant 0 : i32
    return %c0_i32, %c0_i32_0 : i32, i32
  }
  func.func @transform_2(%arg0: i32) -> (i32, i32) {
    %c0_i32 = arith.constant 0 : i32
    %c0_i32_0 = arith.constant 0 : i32
    %c0_i32_1 = arith.constant 0 : i32
    return %c0_i32, %c0_i32_0 : i32, i32
  }
  func.func @transform_3(%arg0: i32) -> (i32, i32) {
    %c0_i32 = arith.constant 0 : i32
    %c0_i32_0 = arith.constant 0 : i32
    return %arg0, %c0_i32 : i32, i32
  }
}

</mosaic_0001>

<llo_original>
// kernel: patch_embed_forward.1
$region0: #{patch_embed_forward.1}
  #allocation0 [shape = 'u32[]', space=smem, size = 0x4, offset = 0x4, fixed_abs, tag = 'smem constant byte address 0x4 - core index']
  #allocation1 [shape = 'u32[144,128]{1,0:T(1,128)}', space=vmem, size = 0x12000, scoped, tag = 'internal scratch']
  %s0 = inlined_call_operand.vmem [shape: bf16[16,512], index: 0, kind: input, shape index: {}]
  %s1 = inlined_call_operand.vmem [shape: bf16[512,128], index: 1, kind: input, shape index: {}]
  %s2 = inlined_call_operand.vmem [shape: f32[1,128], index: 2, kind: input, shape index: {}]
  %s3 = inlined_call_operand.vmem [shape: f32[16,128], index: 3, kind: output, shape index: {}]
  %s4 = sld [smem:[#allocation0]]
  $region22: #{patch_embed_forward.1} parent=0
    _
  %s6 = ssub.s32 1, %s4
  %s7 = scalar_select 0, %s6, %s4
  // Predicated region
  $region2: #{patch_embed_forward.1} parent=0 // pred_check
    _
  $region3: #{patch_embed_forward.1} parent=0 // pred_check_branch
    %9 = sbr.rel (0) target = $region5
  $region4: #{patch_embed_forward.1} parent=0 // pred_region
    _
  $region5: #{patch_embed_forward.1} parent=0 // pred_fallthru
    _
  // Predicated region
  $region6: #{patch_embed_forward.1} parent=0 // pred_check
    _
  $region7: #{patch_embed_forward.1} parent=0 // pred_check_branch
    %11 = sbr.rel (0) target = $region9
  $region8: #{patch_embed_forward.1} parent=0 // pred_region
    _
  $region9: #{patch_embed_forward.1} parent=0 // pred_fallthru
    _
  // Predicated region
  $region10: #{patch_embed_forward.1} parent=0 // pred_check
    _
  $region11: #{patch_embed_forward.1} parent=0 // pred_check_branch
    %13 = sbr.rel (0) target = $region13
  $region12: #{patch_embed_forward.1} parent=0 // pred_region
    _
  $region13: #{patch_embed_forward.1} parent=0 // pred_fallthru
    _
  %v15 = vld [vmem:[%s0] sm:$0xff]
  %v16 = vld [vmem:[%s0 + $0x8] sm:$0xff]
  %v17 = vld [vmem:[%s0 + $0x10] sm:$0xff]
  %v18 = vld [vmem:[%s0 + $0x18] sm:$0xff]
  %v19 = vld [vmem:[%s1] sm:$0xf]
  %v20 = vld [vmem:[%s1 + $0x4] sm:$0xf]
  %v21 = vld [vmem:[%s1 + $0x8] sm:$0xf]
  %v22 = vld [vmem:[%s1 + $0xc] sm:$0xf]
  %v23 = vld [vmem:[%s1 + $0x10] sm:$0xf]
  %v24 = vld [vmem:[%s1 + $0x14] sm:$0xf]
  %v25 = vld [vmem:[%s1 + $0x18] sm:$0xf]
  %v26 = vld [vmem:[%s1 + $0x1c] sm:$0xf]
  %v27 = vld [vmem:[%s1 + $0x20] sm:$0xf]
  %v28 = vld [vmem:[%s1 + $0x24] sm:$0xf]
  %v29 = vld [vmem:[%s1 + $0x28] sm:$0xf]
  %v30 = vld [vmem:[%s1 + $0x2c] sm:$0xf]
  %v31 = vld [vmem:[%s1 + $0x30] sm:$0xf]
  %v32 = vld [vmem:[%s1 + $0x34] sm:$0xf]
  %v33 = vld [vmem:[%s1 + $0x38] sm:$0xf]
  %v34 = vld [vmem:[%s1 + $0x3c] sm:$0xf]
  %v35 = vld [vmem:[%s1 + $0x40] sm:$0xf]
  %v36 = vld [vmem:[%s1 + $0x44] sm:$0xf]
  %v37 = vld [vmem:[%s1 + $0x48] sm:$0xf]
  %v38 = vld [vmem:[%s1 + $0x4c] sm:$0xf]
  %v39 = vld [vmem:[%s1 + $0x50] sm:$0xf]
  %v40 = vld [vmem:[%s1 + $0x54] sm:$0xf]
  %v41 = vld [vmem:[%s1 + $0x58] sm:$0xf]
  %v42 = vld [vmem:[%s1 + $0x5c] sm:$0xf]
  %v43 = vld [vmem:[%s1 + $0x60] sm:$0xf]
  %v44 = vld [vmem:[%s1 + $0x64] sm:$0xf]
  %v45 = vld [vmem:[%s1 + $0x68] sm:$0xf]
  %v46 = vld [vmem:[%s1 + $0x6c] sm:$0xf]
  %v47 = vld [vmem:[%s1 + $0x70] sm:$0xf]
  %v48 = vld [vmem:[%s1 + $0x74] sm:$0xf]
  %v49 = vld [vmem:[%s1 + $0x78] sm:$0xf]
  %v50 = vld [vmem:[%s1 + $0x7c] sm:$0xf]
  %v51 = vld [vmem:[%s1 + $0x80] sm:$0xf]
  %v52 = vld [vmem:[%s1 + $0x84] sm:$0xf]
  %v53 = vld [vmem:[%s1 + $0x88] sm:$0xf]
  %v54 = vld [vmem:[%s1 + $0x8c] sm:$0xf]
  %v55 = vld [vmem:[%s1 + $0x90] sm:$0xf]
  %v56 = vld [vmem:[%s1 + $0x94] sm:$0xf]
  %v57 = vld [vmem:[%s1 + $0x98] sm:$0xf]
  %v58 = vld [vmem:[%s1 + $0x9c] sm:$0xf]
  %v59 = vld [vmem:[%s1 + $0xa0] sm:$0xf]
  %v60 = vld [vmem:[%s1 + $0xa4] sm:$0xf]
  %v61 = vld [vmem:[%s1 + $0xa8] sm:$0xf]
  %v62 = vld [vmem:[%s1 + $0xac] sm:$0xf]
  %v63 = vld [vmem:[%s1 + $0xb0] sm:$0xf]
  %v64 = vld [vmem:[%s1 + $0xb4] sm:$0xf]
  %v65 = vld [vmem:[%s1 + $0xb8] sm:$0xf]
  %v66 = vld [vmem:[%s1 + $0xbc] sm:$0xf]
  %v67 = vld [vmem:[%s1 + $0xc0] sm:$0xf]
  %v68 = vld [vmem:[%s1 + $0xc4] sm:$0xf]
  %v69 = vld [vmem:[%s1 + $0xc8] sm:$0xf]
  %v70 = vld [vmem:[%s1 + $0xcc] sm:$0xf]
  %v71 = vld [vmem:[%s1 + $0xd0] sm:$0xf]
  %v72 = vld [vmem:[%s1 + $0xd4] sm:$0xf]
  %v73 = vld [vmem:[%s1 + $0xd8] sm:$0xf]
  %v74 = vld [vmem:[%s1 + $0xdc] sm:$0xf]
  %v75 = vld [vmem:[%s1 + $0xe0] sm:$0xf]
  %v76 = vld [vmem:[%s1 + $0xe4] sm:$0xf]
  %v77 = vld [vmem:[%s1 + $0xe8] sm:$0xf]
  %v78 = vld [vmem:[%s1 + $0xec] sm:$0xf]
  %v79 = vld [vmem:[%s1 + $0xf0] sm:$0xf]
  %v80 = vld [vmem:[%s1 + $0xf4] sm:$0xf]
  %v81 = vld [vmem:[%s1 + $0xf8] sm:$0xf]
  %v82 = vld [vmem:[%s1 + $0xfc] sm:$0xf]
  %v83 = vld [vmem:[%s2] sm:$0x1]
  %v85 = vlaneseq
  %v86 = vshrl.u32 %v85, 7
  %v87 = vsub.s32 0, %v86
  %v88 = vrot.slane %v83, %v87
  %v94 = vunpack.c.l.b16 %v15
  %v95 = vunpack.c.h.b16 %v15
  %v96 = vunpack.c.l.b16 %v16
  %v97 = vunpack.c.h.b16 %v16
  %v98 = vunpack.c.l.b16 %v17
  %v99 = vunpack.c.h.b16 %v17
  %v100 = vunpack.c.l.b16 %v18
  %v101 = vunpack.c.h.b16 %v18
  %v102 = vpack.c.b16 %v98, %v94
  %v103 = vpack.c.b16 %v99, %v95
  %v104 = vpack.c.b16 %v100, %v96
  %v105 = vpack.c.b16 %v101, %v97
  %v174 = vunpack.c.l.b16 %v19
  %v175 = vunpack.c.l.b16 %v20
  %v176 = vunpack.c.l.b16 %v21
  %v177 = vunpack.c.l.b16 %v22
  %v178 = vunpack.c.l.b16 %v23
  %v179 = vunpack.c.l.b16 %v24
  %v180 = vunpack.c.l.b16 %v25
  %v181 = vunpack.c.l.b16 %v26
  %v182 = vunpack.c.l.b16 %v27
  %v183 = vunpack.c.l.b16 %v28
  %v184 = vunpack.c.l.b16 %v29
  %v185 = vunpack.c.l.b16 %v30
  %v186 = vunpack.c.l.b16 %v31
  %v187 = vunpack.c.l.b16 %v32
  %v188 = vunpack.c.l.b16 %v33
  %v189 = vunpack.c.l.b16 %v34
  %v190 = vunpack.c.l.b16 %v35
  %v191 = vunpack.c.l.b16 %v36
  %v192 = vunpack.c.l.b16 %v37
  %v193 = vunpack.c.l.b16 %v38
  %v194 = vunpack.c.l.b16 %v39
  %v195 = vunpack.c.l.b16 %v40
  %v196 = vunpack.c.l.b16 %v41
  %v197 = vunpack.c.l.b16 %v42
  %v198 = vunpack.c.l.b16 %v43
  %v199 = vunpack.c.l.b16 %v44
  %v200 = vunpack.c.l.b16 %v45
  %v201 = vunpack.c.l.b16 %v46
  %v202 = vunpack.c.l.b16 %v47
  %v203 = vunpack.c.l.b16 %v48
  %v204 = vunpack.c.l.b16 %v49
  %v205 = vunpack.c.l.b16 %v50
  %v206 = vunpack.c.l.b16 %v51
  %v207 = vunpack.c.l.b16 %v52
  %v208 = vunpack.c.l.b16 %v53
  %v209 = vunpack.c.l.b16 %v54
  %v210 = vunpack.c.l.b16 %v55
  %v211 = vunpack.c.l.b16 %v56
  %v212 = vunpack.c.l.b16 %v57
  %v213 = vunpack.c.l.b16 %v58
  %v214 = vunpack.c.l.b16 %v59
  %v215 = vunpack.c.l.b16 %v60
  %v216 = vunpack.c.l.b16 %v61
  %v217 = vunpack.c.l.b16 %v62
  %v218 = vunpack.c.l.b16 %v63
  %v219 = vunpack.c.l.b16 %v64
  %v220 = vunpack.c.l.b16 %v65
  %v221 = vunpack.c.l.b16 %v66
  %v222 = vunpack.c.l.b16 %v67
  %v223 = vunpack.c.l.b16 %v68
  %v224 = vunpack.c.l.b16 %v69
  %v225 = vunpack.c.l.b16 %v70
  %v226 = vunpack.c.l.b16 %v71
  %v227 = vunpack.c.l.b16 %v72
  %v228 = vunpack.c.l.b16 %v73
  %v229 = vunpack.c.l.b16 %v74
  %v230 = vunpack.c.l.b16 %v75
  %v231 = vunpack.c.l.b16 %v76
  %v232 = vunpack.c.l.b16 %v77
  %v233 = vunpack.c.l.b16 %v78
  %v234 = vunpack.c.l.b16 %v79
  %v235 = vunpack.c.l.b16 %v80
  %v236 = vunpack.c.l.b16 %v81
  %v237 = vunpack.c.l.b16 %v82
  %v238 = vpack.c.b16 %v175, %v174
  %v239 = vpack.c.b16 %v177, %v176
  %v240 = vpack.c.b16 %v179, %v178
  %v241 = vpack.c.b16 %v181, %v180
  %v242 = vpack.c.b16 %v183, %v182
  %v243 = vpack.c.b16 %v185, %v184
  %v244 = vpack.c.b16 %v187, %v186
  %v245 = vpack.c.b16 %v189, %v188
  %v246 = vpack.c.b16 %v191, %v190
  %v247 = vpack.c.b16 %v193, %v192
  %v248 = vpack.c.b16 %v195, %v194
  %v249 = vpack.c.b16 %v197, %v196
  %v250 = vpack.c.b16 %v199, %v198
  %v251 = vpack.c.b16 %v201, %v200
  %v252 = vpack.c.b16 %v203, %v202
  %v253 = vpack.c.b16 %v205, %v204
  %v254 = vpack.c.b16 %v207, %v206
  %v255 = vpack.c.b16 %v209, %v208
  %v256 = vpack.c.b16 %v211, %v210
  %v257 = vpack.c.b16 %v213, %v212
  %v258 = vpack.c.b16 %v215, %v214
  %v259 = vpack.c.b16 %v217, %v216
  %v260 = vpack.c.b16 %v219, %v218
  %v261 = vpack.c.b16 %v221, %v220
  %v262 = vpack.c.b16 %v223, %v222
  %v263 = vpack.c.b16 %v225, %v224
  %v264 = vpack.c.b16 %v227, %v226
  %v265 = vpack.c.b16 %v229, %v228
  %v266 = vpack.c.b16 %v231, %v230
  %v267 = vpack.c.b16 %v233, %v232
  %v268 = vpack.c.b16 %v235, %v234
  %v269 = vpack.c.b16 %v237, %v236
  %302 = vmatprep.subr.bf16.mxu0 0
  %303 = vmatpush1.bf16.msra.mxu0 %v238
  %304 = vmatprep.subr.bf16.mxu0 0
  %305 = vmatpush1.bf16.msra.mxu0 %v239
  %306 = vmatprep.subr.bf16.mxu0 0
  %307 = vmatpush1.bf16.msra.mxu0 %v240
  %308 = vmatprep.subr.bf16.mxu0 0
  %309 = vmatpush1.bf16.msra.mxu0 %v241
  %310 = vmatprep.subr.bf16.mxu0 0
  %311 = vmatpush1.bf16.msra.mxu0 %v242
  %312 = vmatprep.subr.bf16.mxu0 0
  %313 = vmatpush1.bf16.msra.mxu0 %v243
  %314 = vmatprep.subr.bf16.mxu0 0
  %315 = vmatpush1.bf16.msra.mxu0 %v244
  %316 = vmatprep.subr.bf16.mxu0 0
  %317 = vmatpush1.bf16.msra.mxu0 %v245
  %318 = vmatprep.subr.bf16.mxu0 0
  %319 = vmatpush1.bf16.msra.mxu0 %v246
  %320 = vmatprep.subr.bf16.mxu0 0
  %321 = vmatpush1.bf16.msra.mxu0 %v247
  %322 = vmatprep.subr.bf16.mxu0 0
  %323 = vmatpush1.bf16.msra.mxu0 %v248
  %324 = vmatprep.subr.bf16.mxu0 0
  %325 = vmatpush1.bf16.msra.mxu0 %v249
  %326 = vmatprep.subr.bf16.mxu0 0
  %327 = vmatpush1.bf16.msra.mxu0 %v250
  %328 = vmatprep.subr.bf16.mxu0 0
  %329 = vmatpush1.bf16.msra.mxu0 %v251
  %330 = vmatprep.subr.bf16.mxu0 0
  %331 = vmatpush1.bf16.msra.mxu0 %v252
  %332 = vmatprep.subr.bf16.mxu0 0
  %333 = vmatpush1.bf16.msra.mxu0 %v253
  %334 = vmatprep.mubr.bf16.mxu0 %v103
  %335 = vmatmul.mubr.bf16.gmra.mrb[0].mxu0 %v102
  %v336 = vpop.f32.mrb[0].mxu0
  %v337 = vadd.f32 %v88, %v336
  %v338 = vpop.f32.mrb[0].mxu0
  %v339 = vpop.f32.mrb[0].mxu0
  %v340 = vadd.f32 %v88, %v339
  %v341 = vpop.f32.mrb[0].mxu0
  %342 = vdwg.mxu0
  %343 = vmatprep.subr.bf16.mxu0 0
  %344 = vmatpush1.bf16.msra.mxu0 %v254
  %345 = vmatprep.subr.bf16.mxu0 0
  %346 = vmatpush1.bf16.msra.mxu0 %v255
  %347 = vmatprep.subr.bf16.mxu0 0
  %348 = vmatpush1.bf16.msra.mxu0 %v256
  %349 = vmatprep.subr.bf16.mxu0 0
  %350 = vmatpush1.bf16.msra.mxu0 %v257
  %351 = vmatprep.subr.bf16.mxu0 0
  %352 = vmatpush1.bf16.msra.mxu0 %v258
  %353 = vmatprep.subr.bf16.mxu0 0
  %354 = vmatpush1.bf16.msra.mxu0 %v259
  %355 = vmatprep.subr.bf16.mxu0 0
  %356 = vmatpush1.bf16.msra.mxu0 %v260
  %357 = vmatprep.subr.bf16.mxu0 0
  %358 = vmatpush1.bf16.msra.mxu0 %v261
  %359 = vmatprep.subr.bf16.mxu0 0
  %360 = vmatpush1.bf16.msra.mxu0 %v262
  %361 = vmatprep.subr.bf16.mxu0 0
  %362 = vmatpush1.bf16.msra.mxu0 %v263
  %363 = vmatprep.subr.bf16.mxu0 0
  %364 = vmatpush1.bf16.msra.mxu0 %v264
  %365 = vmatprep.subr.bf16.mxu0 0
  %366 = vmatpush1.bf16.msra.mxu0 %v265
  %367 = vmatprep.subr.bf16.mxu0 0
  %368 = vmatpush1.bf16.msra.mxu0 %v266
  %369 = vmatprep.subr.bf16.mxu0 0
  %370 = vmatpush1.bf16.msra.mxu0 %v267
  %371 = vmatprep.subr.bf16.mxu0 0
  %372 = vmatpush1.bf16.msra.mxu0 %v268
  %373 = vmatprep.subr.bf16.mxu0 0
  %374 = vmatpush1.bf16.msra.mxu0 %v269
  %375 = vmatprep.mubr.bf16.mxu0 %v105
  %376 = vmatmul.mubr.bf16.gmra.mrb[0].mxu0 %v104
  %v377 = vpop.f32.mrb[0].mxu0
  %v378 = vadd.f32 %v337, %v377
  %v379 = vpop.f32.mrb[0].mxu0
  %v380 = vpop.f32.mrb[0].mxu0
  %v381 = vadd.f32 %v340, %v380
  %v382 = vpop.f32.mrb[0].mxu0
  %383 = vdwg.mxu0
  %384 = vst [vmem:[%s3] sm:$0xff] %v378
  %385 = vst [vmem:[%s3 + $0x8] sm:$0xff] %v381
  // Predicated region
  $region14: #{patch_embed_forward.1} parent=0 // pred_check
    _
  $region15: #{patch_embed_forward.1} parent=0 // pred_check_branch
    %387 = sbr.rel (0) target = $region17
  $region16: #{patch_embed_forward.1} parent=0 // pred_region
    _
  $region17: #{patch_embed_forward.1} parent=0 // pred_fallthru
    _
  // Predicated region
  $region18: #{patch_embed_forward.1} parent=0 // pred_check
    _
  $region19: #{patch_embed_forward.1} parent=0 // pred_check_branch
    %389 = sbr.rel (0) target = $region21
  $region20: #{patch_embed_forward.1} parent=0 // pred_region
    _
  $region21: #{patch_embed_forward.1} parent=0 // pred_fallthru
    _

</llo_original>
